<compile_context>
chip_gen: v5e
topology: v5e:2x2
jax: 0.10.0
libtpu: 0.0.40
codegen_flags: <defaults>
</compile_context>

<pallas_src>
import functools

import jax
import jax.numpy as jnp
from jax import lax
from jax.experimental import pallas as pl
from jax.experimental.pallas import tpu as pltpu

_LANES = 128
_MAX_BLOCK_ROWS = 2048            # 2048 * 128 * 4 B = 1 MiB per f32 input buffer


def _has_two_tensorcores():
    """True on chips where one JAX device spans two TensorCores."""
    try:
        kind = jax.devices()[0].device_kind.lower()
    except Exception:
        return False
    return any(tag in kind for tag in ("v4", "v5p", "v7"))


def _contrastive_kernel(pred_ref, true_ref, out_ref, *, block_rows, chunk_rows):
    """Accumulate 6 lane-wise partial sums into the resident (48,128) out block.

    Rows 0-7: sum(p | pos), 8-15: sum(p^2 | pos), 16-23: count(pos),
    rows 24-31: sum(p | neg), 32-39: sum(p^2 | neg), 40-47: count(neg).
    """
    j = pl.program_id(1)

    @pl.when(j == 0)
    def _init():
        out_ref[...] = jnp.zeros_like(out_ref)

    g = chunk_rows // 8

    def part(v):
        # Tree-reduce a (chunk_rows, 128) value to (8, 128) — pure VALU adds,
        # no cross-lane movement (doubles as pairwise summation for accuracy).
        if g == 1:
            return v
        return jnp.sum(v.reshape(g, 8, _LANES), axis=0)

    def body(c, carry):
        r = pl.multiple_of(c * chunk_rows, chunk_rows)
        x = pred_ref[pl.ds(r, chunk_rows), :].astype(jnp.float32)
        y = true_ref[pl.ds(r, chunk_rows), :].astype(jnp.float32)

        # sigmoid(x) = 0.5 * (tanh(x/2) + 1): transcendental on the EUP slot,
        # no f32 divide on the VPU.
        p = 0.5 * (jnp.tanh(0.5 * x) + 1.0)

        pos = y == 1.0
        neg = y == 0.0
        p_pos = jnp.where(pos, p, 0.0)          # selects, not cast + multiply
        p_neg = jnp.where(neg, p, 0.0)

        out_ref[0:8, :] += part(p_pos)
        out_ref[8:16, :] += part(p_pos * p)
        out_ref[16:24, :] += part(jnp.where(pos, 1.0, 0.0))
        out_ref[24:32, :] += part(p_neg)
        out_ref[32:40, :] += part(p_neg * p)
        out_ref[40:48, :] += part(jnp.where(neg, 1.0, 0.0))
        return carry

    lax.fori_loop(0, block_rows // chunk_rows, body, 0)


def _class_sums(pred, true):
    """Plain-jnp version of the 6 accumulated quantities (used for the tail)."""
    x = pred.astype(jnp.float32)
    p = 0.5 * (jnp.tanh(0.5 * x) + 1.0)
    y = true.astype(jnp.float32)
    pos = y == 1.0
    neg = y == 0.0
    p_pos = jnp.where(pos, p, 0.0)
    p_neg = jnp.where(neg, p, 0.0)
    return jnp.stack([
        jnp.sum(p_pos), jnp.sum(p_pos * p), jnp.sum(pos.astype(jnp.float32)),
        jnp.sum(p_neg), jnp.sum(p_neg * p), jnp.sum(neg.astype(jnp.float32)),
    ])


def contrastive_loss(y_pred, y_true, epoch=None, model_params=None):
    """ContrastiveLossOptimizedV2.forward (epoch/model do not affect the value)."""
    assert y_pred.shape == y_true.shape
    n = y_pred.size

    pred_flat = jnp.ravel(y_pred)               # free bitcast, keeps native dtype
    true_flat = jnp.ravel(y_true)

    rows = n // _LANES                          # complete 128-lane rows
    rows8 = (rows // 8) * 8                     # sublane-aligned rows

    sums = jnp.zeros((6,), jnp.float32)
    kernel_elems = 0

    if rows8 >= 8:
        # --- tiling / split selection (all static Python ints) ---
        n_splits = 2 if (_has_two_tensorcores() and rows8 >= 16) else 1
        rows_per_split = (rows8 // (8 * n_splits)) * 8      # identical per split
        steps = pl.cdiv(rows_per_split, _MAX_BLOCK_ROWS)
        block_rows = ((rows_per_split // steps) // 8) * 8   # <= _MAX_BLOCK_ROWS
        chunk_rows = next(c for c in (32, 16, 8) if block_rows % c == 0)
        kernel_rows = n_splits * steps * block_rows
        kernel_elems = kernel_rows * _LANES

        if kernel_elems == n:
            # Fully covered: reshape is a free bitcast, zero extra HBM traffic.
            pred2d = pred_flat.reshape(kernel_rows, _LANES)
            true2d = true_flat.reshape(kernel_rows, _LANES)
        else:
            # Rare ragged case: one prefix slice of the aligned bulk (cheaper
            # than padding both inputs); the leftovers go through the jnp tail.
            pred2d = pred_flat[:kernel_elems].reshape(kernel_rows, _LANES)
            true2d = true_flat[:kernel_elems].reshape(kernel_rows, _LANES)

        kernel = functools.partial(
            _contrastive_kernel, block_rows=block_rows, chunk_rows=chunk_rows)
        in_idx = lambda s, j: (s * steps + j, 0)

        out = pl.pallas_call(
            kernel,
            out_shape=jax.ShapeDtypeStruct((n_splits * 48, _LANES), jnp.float32),
            grid_spec=pltpu.PrefetchScalarGridSpec(
                num_scalar_prefetch=0,
                grid=(n_splits, steps),
                in_specs=[
                    pl.BlockSpec((block_rows, _LANES), in_idx),
                    pl.BlockSpec((block_rows, _LANES), in_idx),
                ],
                out_specs=pl.BlockSpec((48, _LANES), lambda s, j: (s, 0)),
            ),
            compiler_params=pltpu.CompilerParams(
                dimension_semantics=("parallel", "arbitrary"),
                vmem_limit_bytes=32 * 1024 * 1024),
        )(pred2d, true2d)

        partials = out.reshape(n_splits, 6, 8, _LANES)
        sums = sums + jnp.sum(partials, axis=(0, 2, 3))

    if kernel_elems < n:
        # Tiny unaligned tail (or everything, for sub-tile inputs) in plain jnp.
        sums = sums + _class_sums(pred_flat[kernel_elems:], true_flat[kernel_elems:])

    s1p, s2p, n_pos, s1n, s2n, n_neg = (sums[i] for i in range(6))
    mean_pos = s1p / n_pos
    mean_neg = s1n / n_neg
    # sum((p - m)^2) = S2 - S1 * m  (since m = S1 / count)
    loss = ((s2p - s1p * mean_pos)
            + (s2n - s1n * mean_neg)
            + (1.0 - mean_pos + mean_neg) ** 2)
    return loss


if __name__ == "__main__":
    key = jax.random.PRNGKey(0)
    k1, k2 = jax.random.split(key)

    # Small NCHW-like logits and {0,1} targets.
    y_pred = jax.random.normal(k1, (2, 4, 16, 16), dtype=jnp.float32)
    y_true = jax.random.bernoulli(k2, 0.5, (2, 4, 16, 16)).astype(jnp.float32)

    loss = jax.jit(contrastive_loss)(y_pred, y_true)
    loss = jax.block_until_ready(loss)

    # Pure-JAX two-pass reference mirroring the torch code exactly.
    p = 1.0 / (1.0 + jnp.exp(-y_pred.astype(jnp.float32)))
    pos = y_true == 1.0
    neg = y_true == 0.0
    mean_pos = jnp.sum(jnp.where(pos, p, 0.0)) / jnp.sum(pos)
    mean_neg = jnp.sum(jnp.where(neg, p, 0.0)) / jnp.sum(neg)
    ref = (jnp.sum(jnp.where(pos, (p - mean_pos) ** 2, 0.0))
           + jnp.sum(jnp.where(neg, (p - mean_neg) ** 2, 0.0))
           + (1.0 - mean_pos + mean_neg) ** 2)

    assert jnp.isfinite(loss), loss
    assert jnp.allclose(loss, ref, rtol=2e-4, atol=1e-3), (loss, ref)

    print("KERNEL_OK")
</pallas_src>

<mosaic_0001>
module attributes {stable_mosaic.version = 11 : i64} {
  func.func @_contrastive_kernel(%arg0: i32, %arg1: i32, %arg2: memref<16x128xf32, #tpu.memory_space<vmem>>, %arg3: memref<16x128xf32, #tpu.memory_space<vmem>>, %arg4: memref<48x128xf32, #tpu.memory_space<vmem>>) attributes {dimension_semantics = [#tpu.dimension_semantics<parallel>, #tpu.dimension_semantics<arbitrary>], iteration_bounds = array<i64: 1, 1>, scalar_prefetch = 0 : i64, scratch_operands = 0 : i64, tpu.core_type = #tpu.core_type<tc>, window_params = [{transform_indices = @transform_0, window_bounds = array<i64: 16, 128>}, {transform_indices = @transform_1, window_bounds = array<i64: 16, 128>}, {transform_indices = @transform_2, window_bounds = array<i64: 48, 128>}]} {
    %c0_i32 = arith.constant 0 : i32
    %0 = arith.cmpi eq, %arg1, %c0_i32 : i32
    %1 = arith.extui %0 : i1 to i32
    %c0_i32_0 = arith.constant 0 : i32
    %2 = arith.cmpi ne, %1, %c0_i32_0 : i32
    scf.if %2 {
      %cst_38 = arith.constant 0.000000e+00 : f32
      %62 = vector.broadcast %cst_38 : f32 to vector<48x128xf32>
      %c0_39 = arith.constant 0 : index
      %c0_40 = arith.constant 0 : index
      %63 = vector.load %arg4[%c0_39, %c0_40] : memref<48x128xf32, #tpu.memory_space<vmem>>, vector<48x128xf32>
      tpu.vector_store %arg4[%c0_39, %c0_40], %62 {strides = array<i32>} : memref<48x128xf32, #tpu.memory_space<vmem>>, vector<48x128xf32>,
    } else {
    }
    %c0_i32_1 = arith.constant 0 : i32
    %c16_i32 = arith.constant 16 : i32
    %3 = arith.muli %c0_i32_1, %c16_i32 : i32
    %4 = tpu.assume_multiple %3, 16 : i32
    %5 = arith.index_cast %4 : i32 to index
    %c0 = arith.constant 0 : index
    %6 = vector.load %arg2[%5, %c0] : memref<16x128xf32, #tpu.memory_space<vmem>>, vector<16x128xf32>
    %7 = arith.index_cast %4 : i32 to index
    %c0_2 = arith.constant 0 : index
    %8 = vector.load %arg3[%7, %c0_2] : memref<16x128xf32, #tpu.memory_space<vmem>>, vector<16x128xf32>
    %cst = arith.constant 5.000000e-01 : f32
    %9 = vector.broadcast %cst : f32 to vector<16x128xf32>
    %10 = arith.mulf %9, %6 : vector<16x128xf32>
    %11 = math.tanh %10 : vector<16x128xf32>
    %cst_3 = arith.constant 1.000000e+00 : f32
    %12 = vector.broadcast %cst_3 : f32 to vector<16x128xf32>
    %13 = arith.addf %11, %12 : vector<16x128xf32>
    %cst_4 = arith.constant 5.000000e-01 : f32
    %14 = vector.broadcast %cst_4 : f32 to vector<16x128xf32>
    %15 = arith.mulf %14, %13 : vector<16x128xf32>
    %cst_5 = arith.constant 1.000000e+00 : f32
    %16 = vector.broadcast %cst_5 : f32 to vector<16x128xf32>
    %17 = arith.cmpf oeq, %8, %16 : vector<16x128xf32>
    %cst_6 = arith.constant 0.000000e+00 : f32
    %18 = vector.broadcast %cst_6 : f32 to vector<16x128xf32>
    %19 = arith.cmpf oeq, %8, %18 : vector<16x128xf32>
    %cst_7 = arith.constant 0.000000e+00 : f32
    %20 = vector.broadcast %cst_7 : f32 to vector<16x128xf32>
    %21 = arith.select %17, %15, %20 : vector<16x128xi1>, vector<16x128xf32>
    %cst_8 = arith.constant 0.000000e+00 : f32
    %22 = vector.broadcast %cst_8 : f32 to vector<16x128xf32>
    %23 = arith.select %19, %15, %22 : vector<16x128xi1>, vector<16x128xf32>
    %c0_9 = arith.constant 0 : index
    %c0_10 = arith.constant 0 : index
    %24 = vector.load %arg4[%c0_9, %c0_10] : memref<48x128xf32, #tpu.memory_space<vmem>>, vector<8x128xf32>
    %25 = vector.shape_cast %21 : vector<16x128xf32> to vector<2x8x128xf32>
    %cst_11 = arith.constant dense<0.000000e+00> : vector<8x128xf32>
    %26 = vector.multi_reduction <add>, %25, %cst_11 [0] : vector<2x8x128xf32> to vector<8x128xf32>
    %27 = arith.addf %24, %26 : vector<8x128xf32>
    %c0_12 = arith.constant 0 : index
    %c0_13 = arith.constant 0 : index
    %28 = vector.load %arg4[%c0_12, %c0_13] : memref<48x128xf32, #tpu.memory_space<vmem>>, vector<8x128xf32>
    tpu.vector_store %arg4[%c0_12, %c0_13], %27 {strides = array<i32>} : memref<48x128xf32, #tpu.memory_space<vmem>>, vector<8x128xf32>,
    %c8 = arith.constant 8 : index
    %c0_14 = arith.constant 0 : index
    %29 = vector.load %arg4[%c8, %c0_14] : memref<48x128xf32, #tpu.memory_space<vmem>>, vector<8x128xf32>
    %30 = arith.mulf %21, %15 : vector<16x128xf32>
    %31 = vector.shape_cast %30 : vector<16x128xf32> to vector<2x8x128xf32>
    %cst_15 = arith.constant dense<0.000000e+00> : vector<8x128xf32>
    %32 = vector.multi_reduction <add>, %31, %cst_15 [0] : vector<2x8x128xf32> to vector<8x128xf32>
    %33 = arith.addf %29, %32 : vector<8x128xf32>
    %c8_16 = arith.constant 8 : index
    %c0_17 = arith.constant 0 : index
    %34 = vector.load %arg4[%c8_16, %c0_17] : memref<48x128xf32, #tpu.memory_space<vmem>>, vector<8x128xf32>
    tpu.vector_store %arg4[%c8_16, %c0_17], %33 {strides = array<i32>} : memref<48x128xf32, #tpu.memory_space<vmem>>, vector<8x128xf32>,
    %c16 = arith.constant 16 : index
    %c0_18 = arith.constant 0 : index
    %35 = vector.load %arg4[%c16, %c0_18] : memref<48x128xf32, #tpu.memory_space<vmem>>, vector<8x128xf32>
    %cst_19 = arith.constant 1.000000e+00 : f32
    %cst_20 = arith.constant 0.000000e+00 : f32
    %36 = vector.broadcast %cst_19 : f32 to vector<16x128xf32>
    %37 = vector.broadcast %cst_20 : f32 to vector<16x128xf32>
    %38 = arith.select %17, %36, %37 : vector<16x128xi1>, vector<16x128xf32>
    %39 = vector.shape_cast %38 : vector<16x128xf32> to vector<2x8x128xf32>
    %cst_21 = arith.constant dense<0.000000e+00> : vector<8x128xf32>
    %40 = vector.multi_reduction <add>, %39, %cst_21 [0] : vector<2x8x128xf32> to vector<8x128xf32>
    %41 = arith.addf %35, %40 : vector<8x128xf32>
    %c16_22 = arith.constant 16 : index
    %c0_23 = arith.constant 0 : index
    %42 = vector.load %arg4[%c16_22, %c0_23] : memref<48x128xf32, #tpu.memory_space<vmem>>, vector<8x128xf32>
    tpu.vector_store %arg4[%c16_22, %c0_23], %41 {strides = array<i32>} : memref<48x128xf32, #tpu.memory_space<vmem>>, vector<8x128xf32>,
    %c24 = arith.constant 24 : index
    %c0_24 = arith.constant 0 : index
    %43 = vector.load %arg4[%c24, %c0_24] : memref<48x128xf32, #tpu.memory_space<vmem>>, vector<8x128xf32>
    %44 = vector.shape_cast %23 : vector<16x128xf32> to vector<2x8x128xf32>
    %cst_25 = arith.constant dense<0.000000e+00> : vector<8x128xf32>
    %45 = vector.multi_reduction <add>, %44, %cst_25 [0] : vector<2x8x128xf32> to vector<8x128xf32>
    %46 = arith.addf %43, %45 : vector<8x128xf32>
    %c24_26 = arith.constant 24 : index
    %c0_27 = arith.constant 0 : index
    %47 = vector.load %arg4[%c24_26, %c0_27] : memref<48x128xf32, #tpu.memory_space<vmem>>, vector<8x128xf32>
    tpu.vector_store %arg4[%c24_26, %c0_27], %46 {strides = array<i32>} : memref<48x128xf32, #tpu.memory_space<vmem>>, vector<8x128xf32>,
    %c32 = arith.constant 32 : index
    %c0_28 = arith.constant 0 : index
    %48 = vector.load %arg4[%c32, %c0_28] : memref<48x128xf32, #tpu.memory_space<vmem>>, vector<8x128xf32>
    %49 = arith.mulf %23, %15 : vector<16x128xf32>
    %50 = vector.shape_cast %49 : vector<16x128xf32> to vector<2x8x128xf32>
    %cst_29 = arith.constant dense<0.000000e+00> : vector<8x128xf32>
    %51 = vector.multi_reduction <add>, %50, %cst_29 [0] : vector<2x8x128xf32> to vector<8x128xf32>
    %52 = arith.addf %48, %51 : vector<8x128xf32>
    %c32_30 = arith.constant 32 : index
    %c0_31 = arith.constant 0 : index
    %53 = vector.load %arg4[%c32_30, %c0_31] : memref<48x128xf32, #tpu.memory_space<vmem>>, vector<8x128xf32>
    tpu.vector_store %arg4[%c32_30, %c0_31], %52 {strides = array<i32>} : memref<48x128xf32, #tpu.memory_space<vmem>>, vector<8x128xf32>,
    %c40 = arith.constant 40 : index
    %c0_32 = arith.constant 0 : index
    %54 = vector.load %arg4[%c40, %c0_32] : memref<48x128xf32, #tpu.memory_space<vmem>>, vector<8x128xf32>
    %cst_33 = arith.constant 1.000000e+00 : f32
    %cst_34 = arith.constant 0.000000e+00 : f32
    %55 = vector.broadcast %cst_33 : f32 to vector<16x128xf32>
    %56 = vector.broadcast %cst_34 : f32 to vector<16x128xf32>
    %57 = arith.select %19, %55, %56 : vector<16x128xi1>, vector<16x128xf32>
    %58 = vector.shape_cast %57 : vector<16x128xf32> to vector<2x8x128xf32>
    %cst_35 = arith.constant dense<0.000000e+00> : vector<8x128xf32>
    %59 = vector.multi_reduction <add>, %58, %cst_35 [0] : vector<2x8x128xf32> to vector<8x128xf32>
    %60 = arith.addf %54, %59 : vector<8x128xf32>
    %c40_36 = arith.constant 40 : index
    %c0_37 = arith.constant 0 : index
    %61 = vector.load %arg4[%c40_36, %c0_37] : memref<48x128xf32, #tpu.memory_space<vmem>>, vector<8x128xf32>
    tpu.vector_store %arg4[%c40_36, %c0_37], %60 {strides = array<i32>} : memref<48x128xf32, #tpu.memory_space<vmem>>, vector<8x128xf32>,
    %c1_i32 = arith.constant 1 : i32
    return
  }
  func.func @transform_0(%arg0: i32, %arg1: i32) -> (i32, i32) {
    %c1_i32 = arith.constant 1 : i32
    %0 = arith.muli %arg0, %c1_i32 : i32
    %1 = arith.addi %0, %arg1 : i32
    %c0_i32 = arith.constant 0 : i32
    %c0_i32_0 = arith.constant 0 : i32
    return %1, %c0_i32 : i32, i32
  }
  func.func @transform_1(%arg0: i32, %arg1: i32) -> (i32, i32) {
    %c1_i32 = arith.constant 1 : i32
    %0 = arith.muli %arg0, %c1_i32 : i32
    %1 = arith.addi %0, %arg1 : i32
    %c0_i32 = arith.constant 0 : i32
    %c0_i32_0 = arith.constant 0 : i32
    return %1, %c0_i32 : i32, i32
  }
  func.func @transform_2(%arg0: i32, %arg1: i32) -> (i32, i32) {
    %c0_i32 = arith.constant 0 : i32
    %c0_i32_0 = arith.constant 0 : i32
    return %arg0, %c0_i32 : i32, i32
  }
}

</mosaic_0001>

<llo_original>
// kernel: contrastive_loss.1
$region0: #{contrastive_loss.1}
  #allocation0 [shape = 'u32[]', space=smem, size = 0x4, offset = 0x4, fixed_abs, tag = 'smem constant byte address 0x4 - core index']
  #allocation1 [shape = 'u32[72,128]{1,0:T(1,128)}', space=vmem, size = 0x9000, scoped, tag = 'internal scratch']
  %s0 = inlined_call_operand.vmem [shape: f32[16,128], index: 0, kind: input, shape index: {}]
  %s1 = inlined_call_operand.vmem [shape: f32[16,128], index: 1, kind: input, shape index: {}]
  %s2 = inlined_call_operand.vmem [shape: f32[48,128], index: 2, kind: output, shape index: {}]
  %s3 = sld [smem:[#allocation0]]
  $region22: #{contrastive_loss.1} parent=0
    _
  %s5 = ssub.s32 1, %s3
  %s6 = scalar_select 0, %s5, %s3
  // Predicated region
  $region2: #{contrastive_loss.1} parent=0 // pred_check
    _
  $region3: #{contrastive_loss.1} parent=0 // pred_check_branch
    %8 = sbr.rel (0) target = $region5
  $region4: #{contrastive_loss.1} parent=0 // pred_region
    %s9 = sadd.s32 0, 0
    %s10 = smul.u32 2, %s9
    %p11 = scmp.lt.s32.totalorder %s10, 1
    %s12 = scalar_select %p11, %s10, 1
    %s13 = smul.addr %s12, 8
    %s14 = scalar_lea.vmem %s0, %s13
    %s15 = sadd.s32 0, 0
    %s16 = smul.u32 2, %s15
  $region5: #{contrastive_loss.1} parent=0 // pred_fallthru
    _
  // Predicated region
  $region6: #{contrastive_loss.1} parent=0 // pred_check
    _
  $region7: #{contrastive_loss.1} parent=0 // pred_check_branch
    %18 = sbr.rel (0) target = $region9
  $region8: #{contrastive_loss.1} parent=0 // pred_region
    %s19 = sadd.s32 0, 0
    %s20 = smul.u32 2, %s19
    %p21 = scmp.lt.s32.totalorder %s20, 1
    %s22 = scalar_select %p21, %s20, 1
    %s23 = smul.addr %s22, 8
    %s24 = scalar_lea.vmem %s1, %s23
    %s25 = sadd.s32 0, 0
    %s26 = smul.u32 2, %s25
  $region9: #{contrastive_loss.1} parent=0 // pred_fallthru
    _
  %s27 = sadd.s32 0, 0
  %s28 = smul.u32 2, %s27
  %p29 = scmp.lt.s32.totalorder %s28, 1
  %s30 = scalar_select %p29, %s28, 1
  %s31 = smul.addr %s30, 8
  %s32 = scalar_lea.vmem %s0, %s31
  %s33 = sadd.s32 0, 0
  %s34 = smul.u32 2, %s33
  %p35 = scmp.lt.s32.totalorder %s34, 1
  %s36 = scalar_select %p35, %s34, 1
  %s37 = smul.addr %s36, 8
  %s38 = scalar_lea.vmem %s1, %s37
  %s39 = sadd.s32 0, 0
  %s40 = smul.u32 2, %s39
  %p41 = scmp.lt.s32.totalorder %s40, 1
  %s42 = scalar_select %p41, %s40, 1
  %s43 = smul.addr %s42, 8
  %s44 = scalar_lea.vmem %s0, %s43
  %s45 = sadd.s32 0, 0
  %s46 = smul.u32 2, %s45
  %s47 = sadd.s32 0, 0
  %s48 = smul.u32 2, %s47
  %p49 = scmp.lt.s32.totalorder %s48, 1
  %s50 = scalar_select %p49, %s48, 1
  %s51 = smul.addr %s50, 8
  %s52 = scalar_lea.vmem %s1, %s51
  %s53 = sadd.s32 0, 0
  %s54 = smul.u32 2, %s53
  %p55 = scmp.eq.s32.totalorder 0, 0
  // Predicated region
  $region10: #{contrastive_loss.1} parent=0 // pred_check
    %p56 = pneg %p55
  $region11: #{contrastive_loss.1} parent=0 // pred_check_branch
    %58 = sbr.rel (%p56) target = $region13
  $region12: #{contrastive_loss.1} parent=0 // pred_region
    %59 = vst [vmem:[%s2] sm:$0xff] 0.0
    %60 = vst [vmem:[%s2 + $0x8] sm:$0xff] 0.0
    %61 = vst [vmem:[%s2 + $0x10] sm:$0xff] 0.0
    %62 = vst [vmem:[%s2 + $0x18] sm:$0xff] 0.0
    %63 = vst [vmem:[%s2 + $0x20] sm:$0xff] 0.0
    %64 = vst [vmem:[%s2 + $0x28] sm:$0xff] 0.0
  $region13: #{contrastive_loss.1} parent=0 // pred_fallthru
    _
  %v65 = vld [vmem:[%s44] sm:$0xff]
  %v66 = vld [vmem:[%s44 + $0x8] sm:$0xff]
  %v67 = vld [vmem:[%s52] sm:$0xff]
  %v68 = vld [vmem:[%s52 + $0x8] sm:$0xff]
  %v69 = vmul.f32 %v65, 0.5
  %v70 = vmul.f32 %v66, 0.5
  %v71 = vtanh.pop %v69
  %v72 = vtanh.pop %v70
  %v73 = vadd.f32 %v71, 1.0
  %v74 = vadd.f32 %v72, 1.0
  %v75 = vmul.f32 %v73, 0.5
  %v76 = vmul.f32 %v74, 0.5
  %vm77 = vcmp.eq.f32.partialorder %v67, 1.0
  %vm78 = vcmp.eq.f32.partialorder %v68, 1.0
  %vm79 = vcmp.eq.f32.partialorder %v67, 0.0
  %vm80 = vcmp.eq.f32.partialorder %v68, 0.0
  %v81 = vsel %vm77, %v75, 0.0
  %v82 = vsel %vm78, %v76, 0.0
  %v83 = vsel %vm79, %v75, 0.0
  %v84 = vsel %vm80, %v76, 0.0
  %v85 = vld [vmem:[%s2] sm:$0xff]
  %v86 = vadd.f32 %v81, %v82
  %v87 = vadd.f32 %v85, %v86
  %88 = vst [vmem:[%s2] sm:$0xff] %v87
  %v89 = vld [vmem:[%s2 + $0x8] sm:$0xff]
  %v90 = vmul.f32 %v81, %v75
  %v91 = vmul.f32 %v82, %v76
  %v92 = vadd.f32 %v90, %v91
  %v93 = vadd.f32 %v89, %v92
  %94 = vst [vmem:[%s2 + $0x8] sm:$0xff] %v93
  %v95 = vld [vmem:[%s2 + $0x10] sm:$0xff]
  %v96 = vsel %vm77, 1.0, 0.0
  %v97 = vsel %vm78, 1.0, 0.0
  %v98 = vadd.f32 %v96, %v97
  %v99 = vadd.f32 %v95, %v98
  %100 = vst [vmem:[%s2 + $0x10] sm:$0xff] %v99
  %v101 = vld [vmem:[%s2 + $0x18] sm:$0xff]
  %v102 = vadd.f32 %v83, %v84
  %v103 = vadd.f32 %v101, %v102
  %104 = vst [vmem:[%s2 + $0x18] sm:$0xff] %v103
  %v105 = vld [vmem:[%s2 + $0x20] sm:$0xff]
  %v106 = vmul.f32 %v83, %v75
  %v107 = vmul.f32 %v84, %v76
  %v108 = vadd.f32 %v106, %v107
  %v109 = vadd.f32 %v105, %v108
  %110 = vst [vmem:[%s2 + $0x20] sm:$0xff] %v109
  %v111 = vld [vmem:[%s2 + $0x28] sm:$0xff]
  %v112 = vsel %vm79, 1.0, 0.0
  %v113 = vsel %vm80, 1.0, 0.0
  %v114 = vadd.f32 %v112, %v113
  %v115 = vadd.f32 %v111, %v114
  %116 = vst [vmem:[%s2 + $0x28] sm:$0xff] %v115
  // Predicated region
  $region14: #{contrastive_loss.1} parent=0 // pred_check
    _
  $region15: #{contrastive_loss.1} parent=0 // pred_check_branch
    %118 = sbr.rel (0) target = $region17
  $region16: #{contrastive_loss.1} parent=0 // pred_region
    _
  $region17: #{contrastive_loss.1} parent=0 // pred_fallthru
    _
  // Predicated region
  $region18: #{contrastive_loss.1} parent=0 // pred_check
    _
  $region19: #{contrastive_loss.1} parent=0 // pred_check_branch
    %120 = sbr.rel (0) target = $region21
  $region20: #{contrastive_loss.1} parent=0 // pred_region
    _
  $region21: #{contrastive_loss.1} parent=0 // pred_fallthru
    _

</llo_original>
